<compile_context>
chip_gen: v7x
topology: tpu7x:2x2x1
jax: 0.10.0
libtpu: 0.0.40
codegen_flags: <defaults>
</compile_context>

<pallas_src>
import jax
import jax.numpy as jnp
from jax.experimental import pallas as pl
from jax.experimental.pallas import tpu as pltpu

# ----------------------------- sizes -----------------------------------------
B = 2          # batch
T = 8          # seq_len (caption length)
FEAT_LEN = 4   # number of visual features per clip
D_IMG = 32     # visual feature dim (shared by attn_fts and motion_fts)
E = 32         # word embedding dim
H = 32         # decoder hidden dim
V = 128        # vocab size (lane-dense output)
PAD = 0

TB = T * B     # 16 rows, time-major flattened (row = t*B + b)
G4 = 4 * H     # 128 = one full lane width for the fused LSTM gates


# ----------------------------- Pallas kernel ---------------------------------
def captioning_kernel(seq_ref, emb_ref, wpack_ref, spack_ref, out_ref):
    """Whole teacher-forcing decode (all T steps) in one invocation.

    seq_ref   : (T*B, 1) int32  time-major token ids
    emb_ref   : (V, E)          embedding table
    wpack_ref : (3H, 4H)        rows [0:E)=W_x, [E:E+H)=W_hh, [E+H:E+2H)=W_out
    spack_ref : (8, 4H)         rows [0:B)=b_eff, [B]=b_out, [B+1:B+3)=h0(pad),
                                rows [B+3:B+5)=c0(pad), last row zero pad
    out_ref   : (T*B, V)        log-probs (lane-dense, time-major)
    """
    # ---- unpack coalesced operands (static slices) ---------------------------
    wx = wpack_ref[0:E, :]                     # (E, 4H)  word-emb -> gates
    whh = wpack_ref[E:E + H, :]                # (H, 4H)  hidden   -> gates
    wout = wpack_ref[E + H:E + 2 * H, :]       # (H, V)   vocab projection

    sp = spack_ref[...]                        # (8, 4H)
    beff = sp[0:B, :]                          # (B, 4H)  bias + folded visual ctx
    bout = sp[B:B + 1, :]                      # (1, V)
    h = sp[B + 1:B + 1 + B, 0:H]               # (B, H)   h0
    c = sp[B + 1 + B:B + 1 + 2 * B, 0:H]       # (B, H)   c0

    # ---- in-kernel embedding gather as a one-hot MXU matmul ------------------
    seq_col = seq_ref[...]                                        # (TB, 1) int32
    lane_v = jax.lax.broadcasted_iota(jnp.int32, (TB, V), 1)
    onehot = (lane_v == seq_col).astype(jnp.float32)              # (TB, V)
    x_emb = jnp.dot(onehot, emb_ref[...],
                    preferred_element_type=jnp.float32)           # (TB, E)

    # ---- batched non-recurrent input GEMM (register-resident) ----------------
    gx = jnp.dot(x_emb, wx, preferred_element_type=jnp.float32)   # (TB, 4H)

    # ---- hoisted per-gate lane masks ------------------------------------------
    lane_g = jax.lax.broadcasted_iota(jnp.int32, (B, G4), 1)
    is_g_gate = (lane_g >= 2 * H) & (lane_g < 3 * H)
    act_scale = jnp.where(is_g_gate, jnp.float32(1.0), jnp.float32(0.5))

    # ---- recurrence: only h @ W_hh + gate math per step, fully unrolled -------
    h_list = []
    for t in range(T):                                            # static unroll
        gates = (gx[t * B:(t + 1) * B, :] + beff
                 + jnp.dot(h, whh, preferred_element_type=jnp.float32))  # (B,4H)
        # One tanh over the full 128-lane vreg; sigmoid lanes via
        # sigmoid(x) = 0.5*tanh(0.5*x) + 0.5 (exact).
        t_all = jnp.tanh(gates * act_scale)
        act = jnp.where(is_g_gate, t_all, t_all * 0.5 + 0.5)
        i_g = act[:, 0 * H:1 * H]
        f_g = act[:, 1 * H:2 * H]
        g_g = act[:, 2 * H:3 * H]
        o_g = act[:, 3 * H:4 * H]
        c = f_g * c + i_g * g_g
        h = o_g * jnp.tanh(c)
        h_list.append(h)

    # ---- batched vocab projection + hand-rolled log-softmax epilogue ---------
    hall = jnp.concatenate(h_list, axis=0)                        # (TB, H)
    logits = (jnp.dot(hall, wout, preferred_element_type=jnp.float32)
              + bout)                                             # (TB, V)
    m = jnp.max(logits, axis=-1, keepdims=True)
    s = jnp.sum(jnp.exp(logits - m), axis=-1, keepdims=True)
    out_ref[...] = logits - (m + jnp.log(s))                      # dense (16,128)


def run_decoder(seq_tm, emb, w_pack, s_pack):
    vmem = pl.BlockSpec(memory_space=pltpu.MemorySpace.VMEM)
    return pl.pallas_call(
        captioning_kernel,
        out_shape=jax.ShapeDtypeStruct((TB, V), jnp.float32),
        in_specs=[vmem] * 4,
        out_specs=vmem,
    )(seq_tm, emb, w_pack, s_pack)


# ----------------------------- glue (plain JAX, one jit region) ---------------
def make_params(key):
    ks = jax.random.split(key, 8)
    s = 0.02
    return dict(
        embedding=jax.random.normal(ks[0], (V, E), jnp.float32) * s,
        w_h0=jax.random.normal(ks[1], (D_IMG, H), jnp.float32) * s,
        b_h0=jnp.zeros((H,), jnp.float32),
        w_c0=jax.random.normal(ks[2], (D_IMG, H), jnp.float32) * s,
        b_c0=jnp.zeros((H,), jnp.float32),
        w_ih=jax.random.normal(ks[3], (E + D_IMG, 4 * H), jnp.float32) * s,
        w_hh=jax.random.normal(ks[4], (H, 4 * H), jnp.float32) * s,
        b=jnp.zeros((1, 4 * H), jnp.float32),
        w_out=jax.random.normal(ks[5], (H, V), jnp.float32) * s,
        b_out=jnp.zeros((1, V), jnp.float32),
    )


@jax.jit
def captioning_forward(params, images, motions, seq):
    """Equivalent of CaptioningModel.forward with all optional flags False.

    images:  [B, FEAT_LEN, D_IMG]  (attn_fts)
    motions: [B, FEAT_LEN, D_IMG]  (motion_fts)
    seq:     [B, T] int32          (sent_ids_caption, teacher forcing)
    returns (outputs [B, T, V], loss_match, loss_re, loss_pos)
    """
    # init_hidden: pooled visual features -> initial LSTM state (glue matmuls)
    v_img = jnp.mean(images, axis=1)                     # (B, D_IMG)
    v_mot = jnp.mean(motions, axis=1)                    # (B, D_IMG)
    v_ctx = v_img + v_mot                                # (B, D_IMG)
    h0 = jnp.tanh(v_ctx @ params["w_h0"] + params["b_h0"])
    c0 = jnp.tanh(v_ctx @ params["w_c0"] + params["b_c0"])

    # Split W_ih; fold the time-invariant visual-context contribution + bias
    # into a single (B, 4H) term so the kernel's recurrence only sees x and h.
    w_x = params["w_ih"][:E, :]                          # (E, 4H)
    w_v = params["w_ih"][E:, :]                          # (D_IMG, 4H)
    b_eff = params["b"] + v_ctx @ w_v                    # (B, 4H)

    # Coalesce kernel operands: one (96,128) weight block, one (8,128) small block.
    w_pack = jnp.concatenate([w_x, params["w_hh"], params["w_out"]], axis=0)
    pad_lanes = jnp.zeros((B, G4 - H), jnp.float32)
    s_pack = jnp.concatenate([
        b_eff,                                           # rows 0..B-1
        params["b_out"],                                 # row  B
        jnp.concatenate([h0, pad_lanes], axis=1),        # rows B+1..B+2
        jnp.concatenate([c0, pad_lanes], axis=1),        # rows B+3..B+4
        jnp.zeros((1, G4), jnp.float32),                 # pad to 8 sublanes
    ], axis=0)                                           # (8, 4H)

    # Time-major token ids; embedding lookup happens inside the kernel.
    seq_tm = jnp.transpose(seq, (1, 0)).reshape(TB, 1).astype(jnp.int32)

    out_flat = run_decoder(seq_tm, params["embedding"], w_pack, s_pack)
    outputs = jnp.transpose(out_flat.reshape(T, B, V), (1, 0, 2))  # (B, T, V)

    # TODO(synk): matching / reconstructor / pos-tag losses require the
    # unimplemented abstract sub-modules; flags are False so losses are 0.
    loss_match = jnp.float32(0.0)
    loss_re = jnp.float32(0.0)
    loss_pos = jnp.float32(0.0)
    return outputs, loss_match, loss_re, loss_pos


if __name__ == "__main__":
    key = jax.random.PRNGKey(0)
    k_par, k_img, k_mot, k_seq = jax.random.split(key, 4)

    params = make_params(k_par)
    images = jax.random.normal(k_img, (B, FEAT_LEN, D_IMG), jnp.float32)
    motions = jax.random.normal(k_mot, (B, FEAT_LEN, D_IMG), jnp.float32)
    seq = jax.random.randint(k_seq, (B, T), 1, V, dtype=jnp.int32)

    outputs, loss_match, loss_re, loss_pos = captioning_forward(
        params, images, motions, seq)
    jax.block_until_ready(outputs)

    assert outputs.shape == (B, T, V)
    assert outputs.dtype == jnp.float32
    print("KERNEL_OK")
</pallas_src>

<mosaic_0001>
module attributes {stable_mosaic.version = 11 : i64} {
  func.func @captioning_kernel(%arg0: memref<16x1xi32, #tpu.memory_space<vmem>>, %arg1: memref<128x32xf32, #tpu.memory_space<vmem>>, %arg2: memref<96x128xf32, #tpu.memory_space<vmem>>, %arg3: memref<8x128xf32, #tpu.memory_space<vmem>>, %arg4: memref<16x128xf32, #tpu.memory_space<vmem>>) attributes {dimension_semantics = [], scalar_prefetch = 0 : i64, scratch_operands = 0 : i64, tpu.core_type = #tpu.core_type<tc>} {
    %c0 = arith.constant 0 : index
    %c0_0 = arith.constant 0 : index
    %0 = vector.load %arg2[%c0, %c0_0] : memref<96x128xf32, #tpu.memory_space<vmem>>, vector<32x128xf32>
    %c32 = arith.constant 32 : index
    %c0_1 = arith.constant 0 : index
    %1 = vector.load %arg2[%c32, %c0_1] : memref<96x128xf32, #tpu.memory_space<vmem>>, vector<32x128xf32>
    %c64 = arith.constant 64 : index
    %c0_2 = arith.constant 0 : index
    %2 = vector.load %arg2[%c64, %c0_2] : memref<96x128xf32, #tpu.memory_space<vmem>>, vector<32x128xf32>
    %c0_3 = arith.constant 0 : index
    %c0_4 = arith.constant 0 : index
    %3 = vector.load %arg3[%c0_3, %c0_4] : memref<8x128xf32, #tpu.memory_space<vmem>>, vector<8x128xf32>
    %4 = vector.extract_strided_slice %3 {offsets = [0, 0], sizes = [2, 128], strides = [1, 1]} : vector<8x128xf32> to vector<2x128xf32>
    %5 = vector.extract_strided_slice %3 {offsets = [2, 0], sizes = [1, 128], strides = [1, 1]} : vector<8x128xf32> to vector<1x128xf32>
    %6 = vector.extract_strided_slice %3 {offsets = [3, 0], sizes = [2, 32], strides = [1, 1]} : vector<8x128xf32> to vector<2x32xf32>
    %7 = vector.extract_strided_slice %3 {offsets = [5, 0], sizes = [2, 32], strides = [1, 1]} : vector<8x128xf32> to vector<2x32xf32>
    %c0_5 = arith.constant 0 : index
    %c0_6 = arith.constant 0 : index
    %8 = vector.load %arg0[%c0_5, %c0_6] : memref<16x1xi32, #tpu.memory_space<vmem>>, vector<16x1xi32>
    %9 = tpu.iota {dimensions = array<i32: 1>} : vector<16x128xi32>
    %10 = vector.broadcast %8 : vector<16x1xi32> to vector<16x128xi32>
    %11 = arith.cmpi eq, %9, %10 : vector<16x128xi32>
    %12 = arith.extui %11 : vector<16x128xi1> to vector<16x128xi32>
    %13 = arith.sitofp %12 : vector<16x128xi32> to vector<16x128xf32>
    %c0_7 = arith.constant 0 : index
    %c0_8 = arith.constant 0 : index
    %14 = vector.load %arg1[%c0_7, %c0_8] : memref<128x32xf32, #tpu.memory_space<vmem>>, vector<128x32xf32>
    %cst = arith.constant dense<0.000000e+00> : vector<16x32xf32>
    %15 = tpu.matmul %13, %14, %cst {dimension_numbers = #tpu.dot_dimension_numbers<[1], [0], [0], [1], [0, 0, 1, 1], [], []>} : vector<16x128xf32>, vector<128x32xf32>, vector<16x32xf32> -> vector<16x32xf32>
    %cst_9 = arith.constant dense<0.000000e+00> : vector<16x128xf32>
    %16 = tpu.matmul %15, %0, %cst_9 {dimension_numbers = #tpu.dot_dimension_numbers<[1], [0], [0], [1], [0, 0, 1, 1], [], []>} : vector<16x32xf32>, vector<32x128xf32>, vector<16x128xf32> -> vector<16x128xf32>
    %17 = tpu.iota {dimensions = array<i32: 1>} : vector<2x128xi32>
    %c64_i32 = arith.constant 64 : i32
    %18 = vector.broadcast %c64_i32 : i32 to vector<2x128xi32>
    %19 = arith.cmpi sge, %17, %18 : vector<2x128xi32>
    %c96_i32 = arith.constant 96 : i32
    %20 = vector.broadcast %c96_i32 : i32 to vector<2x128xi32>
    %21 = arith.cmpi slt, %17, %20 : vector<2x128xi32>
    %22 = arith.andi %19, %21 : vector<2x128xi1>
    %cst_10 = arith.constant 1.000000e+00 : f32
    %cst_11 = arith.constant 5.000000e-01 : f32
    %23 = vector.broadcast %cst_10 : f32 to vector<2x128xf32>
    %24 = vector.broadcast %cst_11 : f32 to vector<2x128xf32>
    %25 = arith.select %22, %23, %24 : vector<2x128xi1>, vector<2x128xf32>
    %26 = vector.extract_strided_slice %16 {offsets = [0, 0], sizes = [2, 128], strides = [1, 1]} : vector<16x128xf32> to vector<2x128xf32>
    %27 = arith.addf %26, %4 : vector<2x128xf32>
    %cst_12 = arith.constant dense<0.000000e+00> : vector<2x128xf32>
    %28 = tpu.matmul %6, %1, %cst_12 {dimension_numbers = #tpu.dot_dimension_numbers<[1], [0], [0], [1], [0, 0, 1, 1], [], []>} : vector<2x32xf32>, vector<32x128xf32>, vector<2x128xf32> -> vector<2x128xf32>
    %29 = arith.addf %27, %28 : vector<2x128xf32>
    %30 = arith.mulf %29, %25 : vector<2x128xf32>
    %31 = math.tanh %30 : vector<2x128xf32>
    %cst_13 = arith.constant 5.000000e-01 : f32
    %32 = vector.broadcast %cst_13 : f32 to vector<2x128xf32>
    %33 = arith.mulf %31, %32 : vector<2x128xf32>
    %cst_14 = arith.constant 5.000000e-01 : f32
    %34 = vector.broadcast %cst_14 : f32 to vector<2x128xf32>
    %35 = arith.addf %33, %34 : vector<2x128xf32>
    %36 = arith.select %22, %31, %35 : vector<2x128xi1>, vector<2x128xf32>
    %37 = vector.extract_strided_slice %36 {offsets = [0, 0], sizes = [2, 32], strides = [1, 1]} : vector<2x128xf32> to vector<2x32xf32>
    %38 = vector.extract_strided_slice %36 {offsets = [0, 32], sizes = [2, 32], strides = [1, 1]} : vector<2x128xf32> to vector<2x32xf32>
    %39 = vector.extract_strided_slice %36 {offsets = [0, 64], sizes = [2, 32], strides = [1, 1]} : vector<2x128xf32> to vector<2x32xf32>
    %40 = vector.extract_strided_slice %36 {offsets = [0, 96], sizes = [2, 32], strides = [1, 1]} : vector<2x128xf32> to vector<2x32xf32>
    %41 = arith.mulf %38, %7 : vector<2x32xf32>
    %42 = arith.mulf %37, %39 : vector<2x32xf32>
    %43 = arith.addf %41, %42 : vector<2x32xf32>
    %44 = math.tanh %43 : vector<2x32xf32>
    %45 = arith.mulf %40, %44 : vector<2x32xf32>
    %46 = vector.extract_strided_slice %16 {offsets = [2, 0], sizes = [2, 128], strides = [1, 1]} : vector<16x128xf32> to vector<2x128xf32>
    %47 = arith.addf %46, %4 : vector<2x128xf32>
    %cst_15 = arith.constant dense<0.000000e+00> : vector<2x128xf32>
    %48 = tpu.matmul %45, %1, %cst_15 {dimension_numbers = #tpu.dot_dimension_numbers<[1], [0], [0], [1], [0, 0, 1, 1], [], []>} : vector<2x32xf32>, vector<32x128xf32>, vector<2x128xf32> -> vector<2x128xf32>
    %49 = arith.addf %47, %48 : vector<2x128xf32>
    %50 = arith.mulf %49, %25 : vector<2x128xf32>
    %51 = math.tanh %50 : vector<2x128xf32>
    %cst_16 = arith.constant 5.000000e-01 : f32
    %52 = vector.broadcast %cst_16 : f32 to vector<2x128xf32>
    %53 = arith.mulf %51, %52 : vector<2x128xf32>
    %cst_17 = arith.constant 5.000000e-01 : f32
    %54 = vector.broadcast %cst_17 : f32 to vector<2x128xf32>
    %55 = arith.addf %53, %54 : vector<2x128xf32>
    %56 = arith.select %22, %51, %55 : vector<2x128xi1>, vector<2x128xf32>
    %57 = vector.extract_strided_slice %56 {offsets = [0, 0], sizes = [2, 32], strides = [1, 1]} : vector<2x128xf32> to vector<2x32xf32>
    %58 = vector.extract_strided_slice %56 {offsets = [0, 32], sizes = [2, 32], strides = [1, 1]} : vector<2x128xf32> to vector<2x32xf32>
    %59 = vector.extract_strided_slice %56 {offsets = [0, 64], sizes = [2, 32], strides = [1, 1]} : vector<2x128xf32> to vector<2x32xf32>
    %60 = vector.extract_strided_slice %56 {offsets = [0, 96], sizes = [2, 32], strides = [1, 1]} : vector<2x128xf32> to vector<2x32xf32>
    %61 = arith.mulf %58, %43 : vector<2x32xf32>
    %62 = arith.mulf %57, %59 : vector<2x32xf32>
    %63 = arith.addf %61, %62 : vector<2x32xf32>
    %64 = math.tanh %63 : vector<2x32xf32>
    %65 = arith.mulf %60, %64 : vector<2x32xf32>
    %66 = vector.extract_strided_slice %16 {offsets = [4, 0], sizes = [2, 128], strides = [1, 1]} : vector<16x128xf32> to vector<2x128xf32>
    %67 = arith.addf %66, %4 : vector<2x128xf32>
    %cst_18 = arith.constant dense<0.000000e+00> : vector<2x128xf32>
    %68 = tpu.matmul %65, %1, %cst_18 {dimension_numbers = #tpu.dot_dimension_numbers<[1], [0], [0], [1], [0, 0, 1, 1], [], []>} : vector<2x32xf32>, vector<32x128xf32>, vector<2x128xf32> -> vector<2x128xf32>
    %69 = arith.addf %67, %68 : vector<2x128xf32>
    %70 = arith.mulf %69, %25 : vector<2x128xf32>
    %71 = math.tanh %70 : vector<2x128xf32>
    %cst_19 = arith.constant 5.000000e-01 : f32
    %72 = vector.broadcast %cst_19 : f32 to vector<2x128xf32>
    %73 = arith.mulf %71, %72 : vector<2x128xf32>
    %cst_20 = arith.constant 5.000000e-01 : f32
    %74 = vector.broadcast %cst_20 : f32 to vector<2x128xf32>
    %75 = arith.addf %73, %74 : vector<2x128xf32>
    %76 = arith.select %22, %71, %75 : vector<2x128xi1>, vector<2x128xf32>
    %77 = vector.extract_strided_slice %76 {offsets = [0, 0], sizes = [2, 32], strides = [1, 1]} : vector<2x128xf32> to vector<2x32xf32>
    %78 = vector.extract_strided_slice %76 {offsets = [0, 32], sizes = [2, 32], strides = [1, 1]} : vector<2x128xf32> to vector<2x32xf32>
    %79 = vector.extract_strided_slice %76 {offsets = [0, 64], sizes = [2, 32], strides = [1, 1]} : vector<2x128xf32> to vector<2x32xf32>
    %80 = vector.extract_strided_slice %76 {offsets = [0, 96], sizes = [2, 32], strides = [1, 1]} : vector<2x128xf32> to vector<2x32xf32>
    %81 = arith.mulf %78, %63 : vector<2x32xf32>
    %82 = arith.mulf %77, %79 : vector<2x32xf32>
    %83 = arith.addf %81, %82 : vector<2x32xf32>
    %84 = math.tanh %83 : vector<2x32xf32>
    %85 = arith.mulf %80, %84 : vector<2x32xf32>
    %86 = vector.extract_strided_slice %16 {offsets = [6, 0], sizes = [2, 128], strides = [1, 1]} : vector<16x128xf32> to vector<2x128xf32>
    %87 = arith.addf %86, %4 : vector<2x128xf32>
    %cst_21 = arith.constant dense<0.000000e+00> : vector<2x128xf32>
    %88 = tpu.matmul %85, %1, %cst_21 {dimension_numbers = #tpu.dot_dimension_numbers<[1], [0], [0], [1], [0, 0, 1, 1], [], []>} : vector<2x32xf32>, vector<32x128xf32>, vector<2x128xf32> -> vector<2x128xf32>
    %89 = arith.addf %87, %88 : vector<2x128xf32>
    %90 = arith.mulf %89, %25 : vector<2x128xf32>
    %91 = math.tanh %90 : vector<2x128xf32>
    %cst_22 = arith.constant 5.000000e-01 : f32
    %92 = vector.broadcast %cst_22 : f32 to vector<2x128xf32>
    %93 = arith.mulf %91, %92 : vector<2x128xf32>
    %cst_23 = arith.constant 5.000000e-01 : f32
    %94 = vector.broadcast %cst_23 : f32 to vector<2x128xf32>
    %95 = arith.addf %93, %94 : vector<2x128xf32>
    %96 = arith.select %22, %91, %95 : vector<2x128xi1>, vector<2x128xf32>
    %97 = vector.extract_strided_slice %96 {offsets = [0, 0], sizes = [2, 32], strides = [1, 1]} : vector<2x128xf32> to vector<2x32xf32>
    %98 = vector.extract_strided_slice %96 {offsets = [0, 32], sizes = [2, 32], strides = [1, 1]} : vector<2x128xf32> to vector<2x32xf32>
    %99 = vector.extract_strided_slice %96 {offsets = [0, 64], sizes = [2, 32], strides = [1, 1]} : vector<2x128xf32> to vector<2x32xf32>
    %100 = vector.extract_strided_slice %96 {offsets = [0, 96], sizes = [2, 32], strides = [1, 1]} : vector<2x128xf32> to vector<2x32xf32>
    %101 = arith.mulf %98, %83 : vector<2x32xf32>
    %102 = arith.mulf %97, %99 : vector<2x32xf32>
    %103 = arith.addf %101, %102 : vector<2x32xf32>
    %104 = math.tanh %103 : vector<2x32xf32>
    %105 = arith.mulf %100, %104 : vector<2x32xf32>
    %106 = vector.extract_strided_slice %16 {offsets = [8, 0], sizes = [2, 128], strides = [1, 1]} : vector<16x128xf32> to vector<2x128xf32>
    %107 = arith.addf %106, %4 : vector<2x128xf32>
    %cst_24 = arith.constant dense<0.000000e+00> : vector<2x128xf32>
    %108 = tpu.matmul %105, %1, %cst_24 {dimension_numbers = #tpu.dot_dimension_numbers<[1], [0], [0], [1], [0, 0, 1, 1], [], []>} : vector<2x32xf32>, vector<32x128xf32>, vector<2x128xf32> -> vector<2x128xf32>
    %109 = arith.addf %107, %108 : vector<2x128xf32>
    %110 = arith.mulf %109, %25 : vector<2x128xf32>
    %111 = math.tanh %110 : vector<2x128xf32>
    %cst_25 = arith.constant 5.000000e-01 : f32
    %112 = vector.broadcast %cst_25 : f32 to vector<2x128xf32>
    %113 = arith.mulf %111, %112 : vector<2x128xf32>
    %cst_26 = arith.constant 5.000000e-01 : f32
    %114 = vector.broadcast %cst_26 : f32 to vector<2x128xf32>
    %115 = arith.addf %113, %114 : vector<2x128xf32>
    %116 = arith.select %22, %111, %115 : vector<2x128xi1>, vector<2x128xf32>
    %117 = vector.extract_strided_slice %116 {offsets = [0, 0], sizes = [2, 32], strides = [1, 1]} : vector<2x128xf32> to vector<2x32xf32>
    %118 = vector.extract_strided_slice %116 {offsets = [0, 32], sizes = [2, 32], strides = [1, 1]} : vector<2x128xf32> to vector<2x32xf32>
    %119 = vector.extract_strided_slice %116 {offsets = [0, 64], sizes = [2, 32], strides = [1, 1]} : vector<2x128xf32> to vector<2x32xf32>
    %120 = vector.extract_strided_slice %116 {offsets = [0, 96], sizes = [2, 32], strides = [1, 1]} : vector<2x128xf32> to vector<2x32xf32>
    %121 = arith.mulf %118, %103 : vector<2x32xf32>
    %122 = arith.mulf %117, %119 : vector<2x32xf32>
    %123 = arith.addf %121, %122 : vector<2x32xf32>
    %124 = math.tanh %123 : vector<2x32xf32>
    %125 = arith.mulf %120, %124 : vector<2x32xf32>
    %126 = vector.extract_strided_slice %16 {offsets = [10, 0], sizes = [2, 128], strides = [1, 1]} : vector<16x128xf32> to vector<2x128xf32>
    %127 = arith.addf %126, %4 : vector<2x128xf32>
    %cst_27 = arith.constant dense<0.000000e+00> : vector<2x128xf32>
    %128 = tpu.matmul %125, %1, %cst_27 {dimension_numbers = #tpu.dot_dimension_numbers<[1], [0], [0], [1], [0, 0, 1, 1], [], []>} : vector<2x32xf32>, vector<32x128xf32>, vector<2x128xf32> -> vector<2x128xf32>
    %129 = arith.addf %127, %128 : vector<2x128xf32>
    %130 = arith.mulf %129, %25 : vector<2x128xf32>
    %131 = math.tanh %130 : vector<2x128xf32>
    %cst_28 = arith.constant 5.000000e-01 : f32
    %132 = vector.broadcast %cst_28 : f32 to vector<2x128xf32>
    %133 = arith.mulf %131, %132 : vector<2x128xf32>
    %cst_29 = arith.constant 5.000000e-01 : f32
    %134 = vector.broadcast %cst_29 : f32 to vector<2x128xf32>
    %135 = arith.addf %133, %134 : vector<2x128xf32>
    %136 = arith.select %22, %131, %135 : vector<2x128xi1>, vector<2x128xf32>
    %137 = vector.extract_strided_slice %136 {offsets = [0, 0], sizes = [2, 32], strides = [1, 1]} : vector<2x128xf32> to vector<2x32xf32>
    %138 = vector.extract_strided_slice %136 {offsets = [0, 32], sizes = [2, 32], strides = [1, 1]} : vector<2x128xf32> to vector<2x32xf32>
    %139 = vector.extract_strided_slice %136 {offsets = [0, 64], sizes = [2, 32], strides = [1, 1]} : vector<2x128xf32> to vector<2x32xf32>
    %140 = vector.extract_strided_slice %136 {offsets = [0, 96], sizes = [2, 32], strides = [1, 1]} : vector<2x128xf32> to vector<2x32xf32>
    %141 = arith.mulf %138, %123 : vector<2x32xf32>
    %142 = arith.mulf %137, %139 : vector<2x32xf32>
    %143 = arith.addf %141, %142 : vector<2x32xf32>
    %144 = math.tanh %143 : vector<2x32xf32>
    %145 = arith.mulf %140, %144 : vector<2x32xf32>
    %146 = vector.extract_strided_slice %16 {offsets = [12, 0], sizes = [2, 128], strides = [1, 1]} : vector<16x128xf32> to vector<2x128xf32>
    %147 = arith.addf %146, %4 : vector<2x128xf32>
    %cst_30 = arith.constant dense<0.000000e+00> : vector<2x128xf32>
    %148 = tpu.matmul %145, %1, %cst_30 {dimension_numbers = #tpu.dot_dimension_numbers<[1], [0], [0], [1], [0, 0, 1, 1], [], []>} : vector<2x32xf32>, vector<32x128xf32>, vector<2x128xf32> -> vector<2x128xf32>
    %149 = arith.addf %147, %148 : vector<2x128xf32>
    %150 = arith.mulf %149, %25 : vector<2x128xf32>
    %151 = math.tanh %150 : vector<2x128xf32>
    %cst_31 = arith.constant 5.000000e-01 : f32
    %152 = vector.broadcast %cst_31 : f32 to vector<2x128xf32>
    %153 = arith.mulf %151, %152 : vector<2x128xf32>
    %cst_32 = arith.constant 5.000000e-01 : f32
    %154 = vector.broadcast %cst_32 : f32 to vector<2x128xf32>
    %155 = arith.addf %153, %154 : vector<2x128xf32>
    %156 = arith.select %22, %151, %155 : vector<2x128xi1>, vector<2x128xf32>
    %157 = vector.extract_strided_slice %156 {offsets = [0, 0], sizes = [2, 32], strides = [1, 1]} : vector<2x128xf32> to vector<2x32xf32>
    %158 = vector.extract_strided_slice %156 {offsets = [0, 32], sizes = [2, 32], strides = [1, 1]} : vector<2x128xf32> to vector<2x32xf32>
    %159 = vector.extract_strided_slice %156 {offsets = [0, 64], sizes = [2, 32], strides = [1, 1]} : vector<2x128xf32> to vector<2x32xf32>
    %160 = vector.extract_strided_slice %156 {offsets = [0, 96], sizes = [2, 32], strides = [1, 1]} : vector<2x128xf32> to vector<2x32xf32>
    %161 = arith.mulf %158, %143 : vector<2x32xf32>
    %162 = arith.mulf %157, %159 : vector<2x32xf32>
    %163 = arith.addf %161, %162 : vector<2x32xf32>
    %164 = math.tanh %163 : vector<2x32xf32>
    %165 = arith.mulf %160, %164 : vector<2x32xf32>
    %166 = vector.extract_strided_slice %16 {offsets = [14, 0], sizes = [2, 128], strides = [1, 1]} : vector<16x128xf32> to vector<2x128xf32>
    %167 = arith.addf %166, %4 : vector<2x128xf32>
    %cst_33 = arith.constant dense<0.000000e+00> : vector<2x128xf32>
    %168 = tpu.matmul %165, %1, %cst_33 {dimension_numbers = #tpu.dot_dimension_numbers<[1], [0], [0], [1], [0, 0, 1, 1], [], []>} : vector<2x32xf32>, vector<32x128xf32>, vector<2x128xf32> -> vector<2x128xf32>
    %169 = arith.addf %167, %168 : vector<2x128xf32>
    %170 = arith.mulf %169, %25 : vector<2x128xf32>
    %171 = math.tanh %170 : vector<2x128xf32>
    %cst_34 = arith.constant 5.000000e-01 : f32
    %172 = vector.broadcast %cst_34 : f32 to vector<2x128xf32>
    %173 = arith.mulf %171, %172 : vector<2x128xf32>
    %cst_35 = arith.constant 5.000000e-01 : f32
    %174 = vector.broadcast %cst_35 : f32 to vector<2x128xf32>
    %175 = arith.addf %173, %174 : vector<2x128xf32>
    %176 = arith.select %22, %171, %175 : vector<2x128xi1>, vector<2x128xf32>
    %177 = vector.extract_strided_slice %176 {offsets = [0, 0], sizes = [2, 32], strides = [1, 1]} : vector<2x128xf32> to vector<2x32xf32>
    %178 = vector.extract_strided_slice %176 {offsets = [0, 32], sizes = [2, 32], strides = [1, 1]} : vector<2x128xf32> to vector<2x32xf32>
    %179 = vector.extract_strided_slice %176 {offsets = [0, 64], sizes = [2, 32], strides = [1, 1]} : vector<2x128xf32> to vector<2x32xf32>
    %180 = vector.extract_strided_slice %176 {offsets = [0, 96], sizes = [2, 32], strides = [1, 1]} : vector<2x128xf32> to vector<2x32xf32>
    %181 = arith.mulf %178, %163 : vector<2x32xf32>
    %182 = arith.mulf %177, %179 : vector<2x32xf32>
    %183 = arith.addf %181, %182 : vector<2x32xf32>
    %184 = math.tanh %183 : vector<2x32xf32>
    %185 = arith.mulf %180, %184 : vector<2x32xf32>
    %186 = tpu.concatenate %45, %65, %85, %105, %125, %145, %165, %185 in 0 : vector<2x32xf32>, vector<2x32xf32>, vector<2x32xf32>, vector<2x32xf32>, vector<2x32xf32>, vector<2x32xf32>, vector<2x32xf32>, vector<2x32xf32> -> vector<16x32xf32>
    %cst_36 = arith.constant dense<0.000000e+00> : vector<16x128xf32>
    %187 = tpu.matmul %186, %2, %cst_36 {dimension_numbers = #tpu.dot_dimension_numbers<[1], [0], [0], [1], [0, 0, 1, 1], [], []>} : vector<16x32xf32>, vector<32x128xf32>, vector<16x128xf32> -> vector<16x128xf32>
    %188 = vector.broadcast %5 : vector<1x128xf32> to vector<16x128xf32>
    %189 = arith.addf %187, %188 : vector<16x128xf32>
    %cst_37 = arith.constant dense<0xFF800000> : vector<16xf32>
    %190 = vector.multi_reduction <maximumf>, %189, %cst_37 [1] : vector<16x128xf32> to vector<16xf32>
    %191 = vector.shape_cast %190 : vector<16xf32> to vector<16x1xf32>
    %192 = vector.broadcast %191 : vector<16x1xf32> to vector<16x128xf32>
    %193 = arith.subf %189, %192 : vector<16x128xf32>
    %194 = math.exp %193 : vector<16x128xf32>
    %cst_38 = arith.constant dense<0.000000e+00> : vector<16xf32>
    %195 = vector.multi_reduction <add>, %194, %cst_38 [1] : vector<16x128xf32> to vector<16xf32>
    %196 = vector.shape_cast %195 : vector<16xf32> to vector<16x1xf32>
    %197 = math.log %196 : vector<16x1xf32>
    %198 = arith.addf %191, %197 : vector<16x1xf32>
    %199 = vector.broadcast %198 : vector<16x1xf32> to vector<16x128xf32>
    %200 = arith.subf %189, %199 : vector<16x128xf32>
    %c0_39 = arith.constant 0 : index
    %c0_40 = arith.constant 0 : index
    %201 = vector.load %arg4[%c0_39, %c0_40] : memref<16x128xf32, #tpu.memory_space<vmem>>, vector<16x128xf32>
    tpu.vector_store %arg4[%c0_39, %c0_40], %200 {strides = array<i32>} : memref<16x128xf32, #tpu.memory_space<vmem>>, vector<16x128xf32>,
    return
  }
}

</mosaic_0001>

<llo_original>
// kernel: captioning_forward.1
$region0: #{captioning_forward.1}
  #allocation0 [shape = 'u32[]', space=smem, size = 0x4, offset = 0x4, fixed_abs, tag = 'smem constant byte address 0x4 - core index']
  #allocation1 [shape = 'u32[144,128]{1,0:T(1,128)}', space=vmem, size = 0x12000, scoped, tag = 'internal scratch']
  %s0 = inlined_call_operand.vmem [shape: s32[16,1], index: 0, kind: input, shape index: {}]
  %s1 = inlined_call_operand.vmem [shape: f32[128,32], index: 1, kind: input, shape index: {}]
  %s2 = inlined_call_operand.vmem [shape: f32[96,128], index: 2, kind: input, shape index: {}]
  %s3 = inlined_call_operand.vmem [shape: f32[8,128], index: 3, kind: input, shape index: {}]
  %s4 = inlined_call_operand.vmem [shape: f32[16,128], index: 4, kind: output, shape index: {}]
  %s5 = sld [smem:[#allocation0]]
  $region26: #{captioning_forward.1} parent=0
    _
  %s7 = ssub.s32 1, %s5
  %s8 = scalar_select 0, %s7, %s5
  // Predicated region
  $region2: #{captioning_forward.1} parent=0 // pred_check
    _
  $region3: #{captioning_forward.1} parent=0 // pred_check_branch
    %10 = sbr.rel (0) target = $region5
  $region4: #{captioning_forward.1} parent=0 // pred_region
    _
  $region5: #{captioning_forward.1} parent=0 // pred_fallthru
    _
  // Predicated region
  $region6: #{captioning_forward.1} parent=0 // pred_check
    _
  $region7: #{captioning_forward.1} parent=0 // pred_check_branch
    %12 = sbr.rel (0) target = $region9
  $region8: #{captioning_forward.1} parent=0 // pred_region
    _
  $region9: #{captioning_forward.1} parent=0 // pred_fallthru
    _
  // Predicated region
  $region10: #{captioning_forward.1} parent=0 // pred_check
    _
  $region11: #{captioning_forward.1} parent=0 // pred_check_branch
    %14 = sbr.rel (0) target = $region13
  $region12: #{captioning_forward.1} parent=0 // pred_region
    _
  $region13: #{captioning_forward.1} parent=0 // pred_fallthru
    _
  // Predicated region
  $region14: #{captioning_forward.1} parent=0 // pred_check
    _
  $region15: #{captioning_forward.1} parent=0 // pred_check_branch
    %16 = sbr.rel (0) target = $region17
  $region16: #{captioning_forward.1} parent=0 // pred_region
    _
  $region17: #{captioning_forward.1} parent=0 // pred_fallthru
    _
  %v17 = vld [vmem:[%s2] sm:$0xff]
  %v18 = vld [vmem:[%s2 + $0x8] sm:$0xff]
  %v19 = vld [vmem:[%s2 + $0x10] sm:$0xff]
  %v20 = vld [vmem:[%s2 + $0x18] sm:$0xff]
  %v21 = vld [vmem:[%s2 + $0x20] sm:$0xff]
  %v22 = vld [vmem:[%s2 + $0x28] sm:$0xff]
  %v23 = vld [vmem:[%s2 + $0x30] sm:$0xff]
  %v24 = vld [vmem:[%s2 + $0x38] sm:$0xff]
  %v25 = vld [vmem:[%s2 + $0x40] sm:$0xff]
  %v26 = vld [vmem:[%s2 + $0x48] sm:$0xff]
  %v27 = vld [vmem:[%s2 + $0x50] sm:$0xff]
  %v28 = vld [vmem:[%s2 + $0x58] sm:$0xff]
  %v29 = vld [vmem:[%s3] sm:$0xff]
  %v30 = vld [vmem:[%s0] sm:$0xff]
  %v31 = vld [vmem:[%s0 + $0x8] sm:$0xff]
  %v32 = vlaneseq
  %v33 = vand.u32 %v32, 127
  %34 = vset.pattern.permute.xlu0 0
  %35 = vperm.xlu0 %34, %v30
  %v36 = vpop.permute.xlu0 %35
  %37 = vset.pattern.permute.xlu0 0
  %38 = vperm.xlu0 %37, %v31
  %v39 = vpop.permute.xlu0 %38
  %vm40 = vcmp.eq.s32.totalorder %v33, %v36
  %vm41 = vcmp.eq.s32.totalorder %v33, %v39
  %v42 = vsel %vm40, 1, 0
  %v43 = vsel %vm41, 1, 0
  %v44 = vcvt.s32.f32 %v42
  %v45 = vcvt.s32.f32 %v43
  %v46 = vld [vmem:[%s1] sm:$0xff]
  %v47 = vld [vmem:[%s1 + $0x8] sm:$0xff]
  %v48 = vld [vmem:[%s1 + $0x10] sm:$0xff]
  %v49 = vld [vmem:[%s1 + $0x18] sm:$0xff]
  %v50 = vld [vmem:[%s1 + $0x20] sm:$0xff]
  %v51 = vld [vmem:[%s1 + $0x28] sm:$0xff]
  %v52 = vld [vmem:[%s1 + $0x30] sm:$0xff]
  %v53 = vld [vmem:[%s1 + $0x38] sm:$0xff]
  %v54 = vld [vmem:[%s1 + $0x40] sm:$0xff]
  %v55 = vld [vmem:[%s1 + $0x48] sm:$0xff]
  %v56 = vld [vmem:[%s1 + $0x50] sm:$0xff]
  %v57 = vld [vmem:[%s1 + $0x58] sm:$0xff]
  %v58 = vld [vmem:[%s1 + $0x60] sm:$0xff]
  %v59 = vld [vmem:[%s1 + $0x68] sm:$0xff]
  %v60 = vld [vmem:[%s1 + $0x70] sm:$0xff]
  %v61 = vld [vmem:[%s1 + $0x78] sm:$0xff]
  %62 = vmatprep.subr.mxu0 0.0
  %63 = vmatpush1.msra.mxu0 %v46
  %64 = vmatprep.subr.mxu0 0.0
  %65 = vmatpush1.msra.mxu0 %v47
  %66 = vmatprep.subr.mxu0 0.0
  %67 = vmatpush1.msra.mxu0 %v48
  %68 = vmatprep.subr.mxu0 0.0
  %69 = vmatpush1.msra.mxu0 %v49
  %70 = vmatprep.subr.mxu0 0.0
  %71 = vmatpush1.msra.mxu0 %v50
  %72 = vmatprep.subr.mxu0 0.0
  %73 = vmatpush1.msra.mxu0 %v51
  %74 = vmatprep.subr.mxu0 0.0
  %75 = vmatpush1.msra.mxu0 %v52
  %76 = vmatprep.subr.mxu0 0.0
  %77 = vmatpush1.msra.mxu0 %v53
  %78 = vmatprep.subr.mxu0 0.0
  %79 = vmatpush1.msra.mxu0 %v54
  %80 = vmatprep.subr.mxu0 0.0
  %81 = vmatpush1.msra.mxu0 %v55
  %82 = vmatprep.subr.mxu0 0.0
  %83 = vmatpush1.msra.mxu0 %v56
  %84 = vmatprep.subr.mxu0 0.0
  %85 = vmatpush1.msra.mxu0 %v57
  %86 = vmatprep.subr.mxu0 0.0
  %87 = vmatpush1.msra.mxu0 %v58
  %88 = vmatprep.subr.mxu0 0.0
  %89 = vmatpush1.msra.mxu0 %v59
  %90 = vmatprep.subr.mxu0 0.0
  %91 = vmatpush1.msra.mxu0 %v60
  %92 = vmatprep.subr.mxu0 0.0
  %93 = vmatpush1.msra.mxu0 %v61
  %94 = vmatprep.subr.mxu0 0.0
  %95 = vmatpush1.msra.mxu0 0.0
  %96 = vmatprep.subr.mxu0 0.0
  %97 = vmatpush1.msra.mxu0 0.0
  %98 = vmatprep.subr.mxu0 0.0
  %99 = vmatpush1.msra.mxu0 0.0
  %100 = vmatprep.subr.mxu0 0.0
  %101 = vmatpush1.msra.mxu0 0.0
  %102 = vmatprep.subr.mxu0 0.0
  %103 = vmatpush1.msra.mxu0 0.0
  %104 = vmatprep.subr.mxu0 0.0
  %105 = vmatpush1.msra.mxu0 0.0
  %106 = vmatprep.subr.mxu0 0.0
  %107 = vmatpush1.msra.mxu0 0.0
  %108 = vmatprep.subr.mxu0 0.0
  %109 = vmatpush1.msra.mxu0 0.0
  %110 = vmatprep.subr.mxu0 0.0
  %111 = vmatpush1.msra.mxu0 0.0
  %112 = vmatprep.subr.mxu0 0.0
  %113 = vmatpush1.msra.mxu0 0.0
  %114 = vmatprep.subr.mxu0 0.0
  %115 = vmatpush1.msra.mxu0 0.0
  %116 = vmatprep.subr.mxu0 0.0
  %117 = vmatpush1.msra.mxu0 0.0
  %118 = vmatprep.subr.mxu0 0.0
  %119 = vmatpush1.msra.mxu0 0.0
  %120 = vmatprep.subr.mxu0 0.0
  %121 = vmatpush1.msra.mxu0 0.0
  %122 = vmatprep.subr.mxu0 0.0
  %123 = vmatpush1.msra.mxu0 0.0
  %124 = vmatprep.subr.mxu0 0.0
  %125 = vmatpush1.msra.mxu0 0.0
  %126 = vmatprep.mubr.f32.mxu0 0.0
  %127 = vmatmul.mubr.f32.gmra.mrb[0].mxu0 %v44
  %v128 = vpop.f32.mrb[0].mxu0
  %v129 = vadd.f32 0.0, %v128
  %v130 = vpop.f32.mrb[0].mxu0
  %131 = vmatprep.mubr.f32.mxu0 0.0
  %132 = vmatmul.mubr.f32.gmra.mrb[0].mxu0 %v45
  %v133 = vpop.f32.mrb[0].mxu0
  %v134 = vadd.f32 0.0, %v133
  %v135 = vpop.f32.mrb[0].mxu0
  %136 = vdwg.mxu0
  %vm137 = vcmask 261120
  %v139 = vsel %vm137, %v129, 0
  %v142 = vsel %vm137, %v134, 0
  %144 = vmatprep.subr.mxu0 0.0
  %145 = vmatpush1.msra.mxu0 %v17
  %146 = vmatprep.subr.mxu0 0.0
  %147 = vmatpush1.msra.mxu0 %v18
  %148 = vmatprep.subr.mxu0 0.0
  %149 = vmatpush1.msra.mxu0 %v19
  %150 = vmatprep.subr.mxu0 0.0
  %151 = vmatpush1.msra.mxu0 %v20
  %152 = vmatprep.subr.mxu0 0.0
  %153 = vmatpush1.msra.mxu0 0.0
  %154 = vmatprep.subr.mxu0 0.0
  %155 = vmatpush1.msra.mxu0 0.0
  %156 = vmatprep.subr.mxu0 0.0
  %157 = vmatpush1.msra.mxu0 0.0
  %158 = vmatprep.subr.mxu0 0.0
  %159 = vmatpush1.msra.mxu0 0.0
  %160 = vmatprep.subr.mxu0 0.0
  %161 = vmatpush1.msra.mxu0 0.0
  %162 = vmatprep.subr.mxu0 0.0
  %163 = vmatpush1.msra.mxu0 0.0
  %164 = vmatprep.subr.mxu0 0.0
  %165 = vmatpush1.msra.mxu0 0.0
  %166 = vmatprep.subr.mxu0 0.0
  %167 = vmatpush1.msra.mxu0 0.0
  %168 = vmatprep.subr.mxu0 0.0
  %169 = vmatpush1.msra.mxu0 0.0
  %170 = vmatprep.subr.mxu0 0.0
  %171 = vmatpush1.msra.mxu0 0.0
  %172 = vmatprep.subr.mxu0 0.0
  %173 = vmatpush1.msra.mxu0 0.0
  %174 = vmatprep.subr.mxu0 0.0
  %175 = vmatpush1.msra.mxu0 0.0
  %176 = vmatprep.subr.mxu0 0.0
  %177 = vmatpush1.msra.mxu0 0.0
  %178 = vmatprep.subr.mxu0 0.0
  %179 = vmatpush1.msra.mxu0 0.0
  %180 = vmatprep.subr.mxu0 0.0
  %181 = vmatpush1.msra.mxu0 0.0
  %182 = vmatprep.subr.mxu0 0.0
  %183 = vmatpush1.msra.mxu0 0.0
  %184 = vmatprep.subr.mxu0 0.0
  %185 = vmatpush1.msra.mxu0 0.0
  %186 = vmatprep.subr.mxu0 0.0
  %187 = vmatpush1.msra.mxu0 0.0
  %188 = vmatprep.subr.mxu0 0.0
  %189 = vmatpush1.msra.mxu0 0.0
  %190 = vmatprep.subr.mxu0 0.0
  %191 = vmatpush1.msra.mxu0 0.0
  %192 = vmatprep.subr.mxu0 0.0
  %193 = vmatpush1.msra.mxu0 0.0
  %194 = vmatprep.subr.mxu0 0.0
  %195 = vmatpush1.msra.mxu0 0.0
  %196 = vmatprep.subr.mxu0 0.0
  %197 = vmatpush1.msra.mxu0 0.0
  %198 = vmatprep.subr.mxu0 0.0
  %199 = vmatpush1.msra.mxu0 0.0
  %200 = vmatprep.subr.mxu0 0.0
  %201 = vmatpush1.msra.mxu0 0.0
  %202 = vmatprep.subr.mxu0 0.0
  %203 = vmatpush1.msra.mxu0 0.0
  %204 = vmatprep.subr.mxu0 0.0
  %205 = vmatpush1.msra.mxu0 0.0
  %206 = vmatprep.subr.mxu0 0.0
  %207 = vmatpush1.msra.mxu0 0.0
  %208 = vmatprep.mubr.f32.mxu0 0.0
  %209 = vmatmul.mubr.f32.gmra.mrb[0].mxu0 %v139
  %v210 = vpop.f32.mrb[0].mxu0
  %v211 = vadd.f32 0.0, %v210
  %v212 = vpop.f32.mrb[0].mxu0
  %213 = vmatprep.mubr.f32.mxu0 0.0
  %214 = vmatmul.mubr.f32.gmra.mrb[0].mxu0 %v142
  %v215 = vpop.f32.mrb[0].mxu0
  %v216 = vadd.f32 0.0, %v215
  %v217 = vpop.f32.mrb[0].mxu0
  %218 = vdwg.mxu0
  %vm219 = vcmp.ge.s32.totalorder %v33, 64
  %vm220 = vcmp.lt.s32.totalorder %v33, 96
  %vm221 = vmand %vm219, %vm220
  %v222 = vsel %vm221, 1.0, 0.5
  %v223 = vadd.f32 %v211, %v29
  %v225 = vrot.slane %v29, 3
  %v226 = vsel %vm137, %v225, 0
  %228 = vmatprep.subr.mxu0 0.0
  %229 = vmatpush1.msra.mxu0 %v21
  %230 = vmatprep.subr.mxu0 0.0
  %231 = vmatpush1.msra.mxu0 %v22
  %232 = vmatprep.subr.mxu0 0.0
  %233 = vmatpush1.msra.mxu0 %v23
  %234 = vmatprep.subr.mxu0 0.0
  %235 = vmatpush1.msra.mxu0 %v24
  %236 = vmatprep.subr.mxu0 0.0
  %237 = vmatpush1.msra.mxu0 0.0
  %238 = vmatprep.subr.mxu0 0.0
  %239 = vmatpush1.msra.mxu0 0.0
  %240 = vmatprep.subr.mxu0 0.0
  %241 = vmatpush1.msra.mxu0 0.0
  %242 = vmatprep.subr.mxu0 0.0
  %243 = vmatpush1.msra.mxu0 0.0
  %244 = vmatprep.subr.mxu0 0.0
  %245 = vmatpush1.msra.mxu0 0.0
  %246 = vmatprep.subr.mxu0 0.0
  %247 = vmatpush1.msra.mxu0 0.0
  %248 = vmatprep.subr.mxu0 0.0
  %249 = vmatpush1.msra.mxu0 0.0
  %250 = vmatprep.subr.mxu0 0.0
  %251 = vmatpush1.msra.mxu0 0.0
  %252 = vmatprep.subr.mxu0 0.0
  %253 = vmatpush1.msra.mxu0 0.0
  %254 = vmatprep.subr.mxu0 0.0
  %255 = vmatpush1.msra.mxu0 0.0
  %256 = vmatprep.subr.mxu0 0.0
  %257 = vmatpush1.msra.mxu0 0.0
  %258 = vmatprep.subr.mxu0 0.0
  %259 = vmatpush1.msra.mxu0 0.0
  %260 = vmatprep.subr.mxu0 0.0
  %261 = vmatpush1.msra.mxu0 0.0
  %262 = vmatprep.subr.mxu0 0.0
  %263 = vmatpush1.msra.mxu0 0.0
  %264 = vmatprep.subr.mxu0 0.0
  %265 = vmatpush1.msra.mxu0 0.0
  %266 = vmatprep.subr.mxu0 0.0
  %267 = vmatpush1.msra.mxu0 0.0
  %268 = vmatprep.subr.mxu0 0.0
  %269 = vmatpush1.msra.mxu0 0.0
  %270 = vmatprep.subr.mxu0 0.0
  %271 = vmatpush1.msra.mxu0 0.0
  %272 = vmatprep.subr.mxu0 0.0
  %273 = vmatpush1.msra.mxu0 0.0
  %274 = vmatprep.subr.mxu0 0.0
  %275 = vmatpush1.msra.mxu0 0.0
  %276 = vmatprep.subr.mxu0 0.0
  %277 = vmatpush1.msra.mxu0 0.0
  %278 = vmatprep.subr.mxu0 0.0
  %279 = vmatpush1.msra.mxu0 0.0
  %280 = vmatprep.subr.mxu0 0.0
  %281 = vmatpush1.msra.mxu0 0.0
  %282 = vmatprep.subr.mxu0 0.0
  %283 = vmatpush1.msra.mxu0 0.0
  %284 = vmatprep.subr.mxu0 0.0
  %285 = vmatpush1.msra.mxu0 0.0
  %286 = vmatprep.subr.mxu0 0.0
  %287 = vmatpush1.msra.mxu0 0.0
  %288 = vmatprep.subr.mxu0 0.0
  %289 = vmatpush1.msra.mxu0 0.0
  %290 = vmatprep.subr.mxu0 0.0
  %291 = vmatpush1.msra.mxu0 0.0
  %292 = vmatprep.mubr.f32.mxu0 0.0
  %293 = vmatmul.mubr.f32.gmra.mrb[0].mxu0 %v226
  %v294 = vpop.f32.mrb[0].mxu0
  %v295 = vadd.f32 0.0, %v294
  %v296 = vpop.f32.mrb[0].mxu0
  %297 = vdwg.mxu0
  %v298 = vadd.f32 %v223, %v295
  %v299 = vmul.f32 %v298, %v222
  %v300 = vtanh.pop %v299
  %v301 = vmul.f32 %v300, 0.5
  %v302 = vadd.f32 %v301, 0.5
  %v303 = vsel %vm221, %v300, %v302
  %v304 = vrot.slane %v29, 5
  %305 = vrot.lane.b32.xlu0 %v304, 32
  %v306 = vpop.permute.xlu0 %305
  %v308 = vmul.f32 %v303, %v306
  %310 = vrot.lane.b32.xlu0 %v303, 64
  %v311 = vpop.permute.xlu0 %310
  %v313 = vmul.f32 %v303, %v311
  %315 = vrot.lane.b32.xlu0 %v313, 32
  %v316 = vpop.permute.xlu0 %315
  %v318 = vadd.f32 %v308, %v316
  %v319 = vtanh.pop %v318
  %321 = vrot.lane.b32.xlu0 %v319, 64
  %v322 = vpop.permute.xlu0 %321
  %v324 = vmul.f32 %v303, %v322
  %v325 = vrot.slane %v29, 6
  %v327 = vadd.f32 %v211, %v325
  %329 = vrot.lane.b32.xlu0 %v324, 32
  %v330 = vpop.permute.xlu0 %329
  %v331 = vsel %vm137, %v330, 0
  %333 = vmatprep.subr.mxu0 0.0
  %334 = vmatpush1.msra.mxu0 %v21
  %335 = vmatprep.subr.mxu0 0.0
  %336 = vmatpush1.msra.mxu0 %v22
  %337 = vmatprep.subr.mxu0 0.0
  %338 = vmatpush1.msra.mxu0 %v23
  %339 = vmatprep.subr.mxu0 0.0
  %340 = vmatpush1.msra.mxu0 %v24
  %341 = vmatprep.subr.mxu0 0.0
  %342 = vmatpush1.msra.mxu0 0.0
  %343 = vmatprep.subr.mxu0 0.0
  %344 = vmatpush1.msra.mxu0 0.0
  %345 = vmatprep.subr.mxu0 0.0
  %346 = vmatpush1.msra.mxu0 0.0
  %347 = vmatprep.subr.mxu0 0.0
  %348 = vmatpush1.msra.mxu0 0.0
  %349 = vmatprep.subr.mxu0 0.0
  %350 = vmatpush1.msra.mxu0 0.0
  %351 = vmatprep.subr.mxu0 0.0
  %352 = vmatpush1.msra.mxu0 0.0
  %353 = vmatprep.subr.mxu0 0.0
  %354 = vmatpush1.msra.mxu0 0.0
  %355 = vmatprep.subr.mxu0 0.0
  %356 = vmatpush1.msra.mxu0 0.0
  %357 = vmatprep.subr.mxu0 0.0
  %358 = vmatpush1.msra.mxu0 0.0
  %359 = vmatprep.subr.mxu0 0.0
  %360 = vmatpush1.msra.mxu0 0.0
  %361 = vmatprep.subr.mxu0 0.0
  %362 = vmatpush1.msra.mxu0 0.0
  %363 = vmatprep.subr.mxu0 0.0
  %364 = vmatpush1.msra.mxu0 0.0
  %365 = vmatprep.subr.mxu0 0.0
  %366 = vmatpush1.msra.mxu0 0.0
  %367 = vmatprep.subr.mxu0 0.0
  %368 = vmatpush1.msra.mxu0 0.0
  %369 = vmatprep.subr.mxu0 0.0
  %370 = vmatpush1.msra.mxu0 0.0
  %371 = vmatprep.subr.mxu0 0.0
  %372 = vmatpush1.msra.mxu0 0.0
  %373 = vmatprep.subr.mxu0 0.0
  %374 = vmatpush1.msra.mxu0 0.0
  %375 = vmatprep.subr.mxu0 0.0
  %376 = vmatpush1.msra.mxu0 0.0
  %377 = vmatprep.subr.mxu0 0.0
  %378 = vmatpush1.msra.mxu0 0.0
  %379 = vmatprep.subr.mxu0 0.0
  %380 = vmatpush1.msra.mxu0 0.0
  %381 = vmatprep.subr.mxu0 0.0
  %382 = vmatpush1.msra.mxu0 0.0
  %383 = vmatprep.subr.mxu0 0.0
  %384 = vmatpush1.msra.mxu0 0.0
  %385 = vmatprep.subr.mxu0 0.0
  %386 = vmatpush1.msra.mxu0 0.0
  %387 = vmatprep.subr.mxu0 0.0
  %388 = vmatpush1.msra.mxu0 0.0
  %389 = vmatprep.subr.mxu0 0.0
  %390 = vmatpush1.msra.mxu0 0.0
  %391 = vmatprep.subr.mxu0 0.0
  %392 = vmatpush1.msra.mxu0 0.0
  %393 = vmatprep.subr.mxu0 0.0
  %394 = vmatpush1.msra.mxu0 0.0
  %395 = vmatprep.subr.mxu0 0.0
  %396 = vmatpush1.msra.mxu0 0.0
  %397 = vmatprep.mubr.f32.mxu0 0.0
  %398 = vmatmul.mubr.f32.gmra.mrb[0].mxu0 %v331
  %v399 = vpop.f32.mrb[0].mxu0
  %v400 = vadd.f32 0.0, %v399
  %v401 = vpop.f32.mrb[0].mxu0
  %402 = vdwg.mxu0
  %v404 = vrot.slane %v400, 6
  %v406 = vadd.f32 %v327, %v404
  %v407 = vmul.f32 %v406, %v222
  %v408 = vtanh.pop %v407
  %v409 = vmul.f32 %v408, 0.5
  %v410 = vadd.f32 %v409, 0.5
  %v411 = vsel %vm221, %v408, %v410
  %v413 = vrot.slane %v318, 6
  %v415 = vmul.f32 %v411, %v413
  %417 = vrot.lane.b32.xlu0 %v411, 64
  %v418 = vpop.permute.xlu0 %417
  %v420 = vmul.f32 %v411, %v418
  %422 = vrot.lane.b32.xlu0 %v420, 32
  %v423 = vpop.permute.xlu0 %422
  %v425 = vadd.f32 %v415, %v423
  %v426 = vtanh.pop %v425
  %428 = vrot.lane.b32.xlu0 %v426, 64
  %v429 = vpop.permute.xlu0 %428
  %v431 = vmul.f32 %v411, %v429
  %v432 = vrot.slane %v29, 4
  %v434 = vadd.f32 %v211, %v432
  %v436 = vrot.slane %v431, 2
  %437 = vrot.lane.b32.xlu0 %v436, 32
  %v438 = vpop.permute.xlu0 %437
  %v439 = vsel %vm137, %v438, 0
  %441 = vmatprep.subr.mxu0 0.0
  %442 = vmatpush1.msra.mxu0 %v21
  %443 = vmatprep.subr.mxu0 0.0
  %444 = vmatpush1.msra.mxu0 %v22
  %445 = vmatprep.subr.mxu0 0.0
  %446 = vmatpush1.msra.mxu0 %v23
  %447 = vmatprep.subr.mxu0 0.0
  %448 = vmatpush1.msra.mxu0 %v24
  %449 = vmatprep.subr.mxu0 0.0
  %450 = vmatpush1.msra.mxu0 0.0
  %451 = vmatprep.subr.mxu0 0.0
  %452 = vmatpush1.msra.mxu0 0.0
  %453 = vmatprep.subr.mxu0 0.0
  %454 = vmatpush1.msra.mxu0 0.0
  %455 = vmatprep.subr.mxu0 0.0
  %456 = vmatpush1.msra.mxu0 0.0
  %457 = vmatprep.subr.mxu0 0.0
  %458 = vmatpush1.msra.mxu0 0.0
  %459 = vmatprep.subr.mxu0 0.0
  %460 = vmatpush1.msra.mxu0 0.0
  %461 = vmatprep.subr.mxu0 0.0
  %462 = vmatpush1.msra.mxu0 0.0
  %463 = vmatprep.subr.mxu0 0.0
  %464 = vmatpush1.msra.mxu0 0.0
  %465 = vmatprep.subr.mxu0 0.0
  %466 = vmatpush1.msra.mxu0 0.0
  %467 = vmatprep.subr.mxu0 0.0
  %468 = vmatpush1.msra.mxu0 0.0
  %469 = vmatprep.subr.mxu0 0.0
  %470 = vmatpush1.msra.mxu0 0.0
  %471 = vmatprep.subr.mxu0 0.0
  %472 = vmatpush1.msra.mxu0 0.0
  %473 = vmatprep.subr.mxu0 0.0
  %474 = vmatpush1.msra.mxu0 0.0
  %475 = vmatprep.subr.mxu0 0.0
  %476 = vmatpush1.msra.mxu0 0.0
  %477 = vmatprep.subr.mxu0 0.0
  %478 = vmatpush1.msra.mxu0 0.0
  %479 = vmatprep.subr.mxu0 0.0
  %480 = vmatpush1.msra.mxu0 0.0
  %481 = vmatprep.subr.mxu0 0.0
  %482 = vmatpush1.msra.mxu0 0.0
  %483 = vmatprep.subr.mxu0 0.0
  %484 = vmatpush1.msra.mxu0 0.0
  %485 = vmatprep.subr.mxu0 0.0
  %486 = vmatpush1.msra.mxu0 0.0
  %487 = vmatprep.subr.mxu0 0.0
  %488 = vmatpush1.msra.mxu0 0.0
  %489 = vmatprep.subr.mxu0 0.0
  %490 = vmatpush1.msra.mxu0 0.0
  %491 = vmatprep.subr.mxu0 0.0
  %492 = vmatpush1.msra.mxu0 0.0
  %493 = vmatprep.subr.mxu0 0.0
  %494 = vmatpush1.msra.mxu0 0.0
  %495 = vmatprep.subr.mxu0 0.0
  %496 = vmatpush1.msra.mxu0 0.0
  %497 = vmatprep.subr.mxu0 0.0
  %498 = vmatpush1.msra.mxu0 0.0
  %499 = vmatprep.subr.mxu0 0.0
  %500 = vmatpush1.msra.mxu0 0.0
  %501 = vmatprep.subr.mxu0 0.0
  %502 = vmatpush1.msra.mxu0 0.0
  %503 = vmatprep.subr.mxu0 0.0
  %504 = vmatpush1.msra.mxu0 0.0
  %505 = vmatprep.mubr.f32.mxu0 0.0
  %506 = vmatmul.mubr.f32.gmra.mrb[0].mxu0 %v439
  %v507 = vpop.f32.mrb[0].mxu0
  %v508 = vadd.f32 0.0, %v507
  %v509 = vpop.f32.mrb[0].mxu0
  %510 = vdwg.mxu0
  %v512 = vrot.slane %v508, 4
  %v514 = vadd.f32 %v434, %v512
  %v515 = vmul.f32 %v514, %v222
  %v516 = vtanh.pop %v515
  %v517 = vmul.f32 %v516, 0.5
  %v518 = vadd.f32 %v517, 0.5
  %v519 = vsel %vm221, %v516, %v518
  %v521 = vrot.slane %v425, 6
  %v523 = vmul.f32 %v519, %v521
  %525 = vrot.lane.b32.xlu0 %v519, 64
  %v526 = vpop.permute.xlu0 %525
  %v528 = vmul.f32 %v519, %v526
  %530 = vrot.lane.b32.xlu0 %v528, 32
  %v531 = vpop.permute.xlu0 %530
  %v533 = vadd.f32 %v523, %v531
  %v534 = vtanh.pop %v533
  %536 = vrot.lane.b32.xlu0 %v534, 64
  %v537 = vpop.permute.xlu0 %536
  %v539 = vmul.f32 %v519, %v537
  %v540 = vrot.slane %v29, 2
  %v542 = vadd.f32 %v211, %v540
  %v544 = vrot.slane %v539, 4
  %545 = vrot.lane.b32.xlu0 %v544, 32
  %v546 = vpop.permute.xlu0 %545
  %v547 = vsel %vm137, %v546, 0
  %549 = vmatprep.subr.mxu0 0.0
  %550 = vmatpush1.msra.mxu0 %v21
  %551 = vmatprep.subr.mxu0 0.0
  %552 = vmatpush1.msra.mxu0 %v22
  %553 = vmatprep.subr.mxu0 0.0
  %554 = vmatpush1.msra.mxu0 %v23
  %555 = vmatprep.subr.mxu0 0.0
  %556 = vmatpush1.msra.mxu0 %v24
  %557 = vmatprep.subr.mxu0 0.0
  %558 = vmatpush1.msra.mxu0 0.0
  %559 = vmatprep.subr.mxu0 0.0
  %560 = vmatpush1.msra.mxu0 0.0
  %561 = vmatprep.subr.mxu0 0.0
  %562 = vmatpush1.msra.mxu0 0.0
  %563 = vmatprep.subr.mxu0 0.0
  %564 = vmatpush1.msra.mxu0 0.0
  %565 = vmatprep.subr.mxu0 0.0
  %566 = vmatpush1.msra.mxu0 0.0
  %567 = vmatprep.subr.mxu0 0.0
  %568 = vmatpush1.msra.mxu0 0.0
  %569 = vmatprep.subr.mxu0 0.0
  %570 = vmatpush1.msra.mxu0 0.0
  %571 = vmatprep.subr.mxu0 0.0
  %572 = vmatpush1.msra.mxu0 0.0
  %573 = vmatprep.subr.mxu0 0.0
  %574 = vmatpush1.msra.mxu0 0.0
  %575 = vmatprep.subr.mxu0 0.0
  %576 = vmatpush1.msra.mxu0 0.0
  %577 = vmatprep.subr.mxu0 0.0
  %578 = vmatpush1.msra.mxu0 0.0
  %579 = vmatprep.subr.mxu0 0.0
  %580 = vmatpush1.msra.mxu0 0.0
  %581 = vmatprep.subr.mxu0 0.0
  %582 = vmatpush1.msra.mxu0 0.0
  %583 = vmatprep.subr.mxu0 0.0
  %584 = vmatpush1.msra.mxu0 0.0
  %585 = vmatprep.subr.mxu0 0.0
  %586 = vmatpush1.msra.mxu0 0.0
  %587 = vmatprep.subr.mxu0 0.0
  %588 = vmatpush1.msra.mxu0 0.0
  %589 = vmatprep.subr.mxu0 0.0
  %590 = vmatpush1.msra.mxu0 0.0
  %591 = vmatprep.subr.mxu0 0.0
  %592 = vmatpush1.msra.mxu0 0.0
  %593 = vmatprep.subr.mxu0 0.0
  %594 = vmatpush1.msra.mxu0 0.0
  %595 = vmatprep.subr.mxu0 0.0
  %596 = vmatpush1.msra.mxu0 0.0
  %597 = vmatprep.subr.mxu0 0.0
  %598 = vmatpush1.msra.mxu0 0.0
  %599 = vmatprep.subr.mxu0 0.0
  %600 = vmatpush1.msra.mxu0 0.0
  %601 = vmatprep.subr.mxu0 0.0
  %602 = vmatpush1.msra.mxu0 0.0
  %603 = vmatprep.subr.mxu0 0.0
  %604 = vmatpush1.msra.mxu0 0.0
  %605 = vmatprep.subr.mxu0 0.0
  %606 = vmatpush1.msra.mxu0 0.0
  %607 = vmatprep.subr.mxu0 0.0
  %608 = vmatpush1.msra.mxu0 0.0
  %609 = vmatprep.subr.mxu0 0.0
  %610 = vmatpush1.msra.mxu0 0.0
  %611 = vmatprep.subr.mxu0 0.0
  %612 = vmatpush1.msra.mxu0 0.0
  %613 = vmatprep.mubr.f32.mxu0 0.0
  %614 = vmatmul.mubr.f32.gmra.mrb[0].mxu0 %v547
  %v615 = vpop.f32.mrb[0].mxu0
  %v616 = vadd.f32 0.0, %v615
  %v617 = vpop.f32.mrb[0].mxu0
  %618 = vdwg.mxu0
  %v620 = vrot.slane %v616, 2
  %v622 = vadd.f32 %v542, %v620
  %v623 = vmul.f32 %v622, %v222
  %v624 = vtanh.pop %v623
  %v625 = vmul.f32 %v624, 0.5
  %v626 = vadd.f32 %v625, 0.5
  %v627 = vsel %vm221, %v624, %v626
  %v629 = vrot.slane %v533, 6
  %v631 = vmul.f32 %v627, %v629
  %633 = vrot.lane.b32.xlu0 %v627, 64
  %v634 = vpop.permute.xlu0 %633
  %v636 = vmul.f32 %v627, %v634
  %638 = vrot.lane.b32.xlu0 %v636, 32
  %v639 = vpop.permute.xlu0 %638
  %v641 = vadd.f32 %v631, %v639
  %v642 = vtanh.pop %v641
  %644 = vrot.lane.b32.xlu0 %v642, 64
  %v645 = vpop.permute.xlu0 %644
  %v647 = vmul.f32 %v627, %v645
  %v648 = vadd.f32 %v216, %v29
  %v650 = vrot.slane %v647, 6
  %651 = vrot.lane.b32.xlu0 %v650, 32
  %v652 = vpop.permute.xlu0 %651
  %v653 = vsel %vm137, %v652, 0
  %655 = vmatprep.subr.mxu0 0.0
  %656 = vmatpush1.msra.mxu0 %v21
  %657 = vmatprep.subr.mxu0 0.0
  %658 = vmatpush1.msra.mxu0 %v22
  %659 = vmatprep.subr.mxu0 0.0
  %660 = vmatpush1.msra.mxu0 %v23
  %661 = vmatprep.subr.mxu0 0.0
  %662 = vmatpush1.msra.mxu0 %v24
  %663 = vmatprep.subr.mxu0 0.0
  %664 = vmatpush1.msra.mxu0 0.0
  %665 = vmatprep.subr.mxu0 0.0
  %666 = vmatpush1.msra.mxu0 0.0
  %667 = vmatprep.subr.mxu0 0.0
  %668 = vmatpush1.msra.mxu0 0.0
  %669 = vmatprep.subr.mxu0 0.0
  %670 = vmatpush1.msra.mxu0 0.0
  %671 = vmatprep.subr.mxu0 0.0
  %672 = vmatpush1.msra.mxu0 0.0
  %673 = vmatprep.subr.mxu0 0.0
  %674 = vmatpush1.msra.mxu0 0.0
  %675 = vmatprep.subr.mxu0 0.0
  %676 = vmatpush1.msra.mxu0 0.0
  %677 = vmatprep.subr.mxu0 0.0
  %678 = vmatpush1.msra.mxu0 0.0
  %679 = vmatprep.subr.mxu0 0.0
  %680 = vmatpush1.msra.mxu0 0.0
  %681 = vmatprep.subr.mxu0 0.0
  %682 = vmatpush1.msra.mxu0 0.0
  %683 = vmatprep.subr.mxu0 0.0
  %684 = vmatpush1.msra.mxu0 0.0
  %685 = vmatprep.subr.mxu0 0.0
  %686 = vmatpush1.msra.mxu0 0.0
  %687 = vmatprep.subr.mxu0 0.0
  %688 = vmatpush1.msra.mxu0 0.0
  %689 = vmatprep.subr.mxu0 0.0
  %690 = vmatpush1.msra.mxu0 0.0
  %691 = vmatprep.subr.mxu0 0.0
  %692 = vmatpush1.msra.mxu0 0.0
  %693 = vmatprep.subr.mxu0 0.0
  %694 = vmatpush1.msra.mxu0 0.0
  %695 = vmatprep.subr.mxu0 0.0
  %696 = vmatpush1.msra.mxu0 0.0
  %697 = vmatprep.subr.mxu0 0.0
  %698 = vmatpush1.msra.mxu0 0.0
  %699 = vmatprep.subr.mxu0 0.0
  %700 = vmatpush1.msra.mxu0 0.0
  %701 = vmatprep.subr.mxu0 0.0
  %702 = vmatpush1.msra.mxu0 0.0
  %703 = vmatprep.subr.mxu0 0.0
  %704 = vmatpush1.msra.mxu0 0.0
  %705 = vmatprep.subr.mxu0 0.0
  %706 = vmatpush1.msra.mxu0 0.0
  %707 = vmatprep.subr.mxu0 0.0
  %708 = vmatpush1.msra.mxu0 0.0
  %709 = vmatprep.subr.mxu0 0.0
  %710 = vmatpush1.msra.mxu0 0.0
  %711 = vmatprep.subr.mxu0 0.0
  %712 = vmatpush1.msra.mxu0 0.0
  %713 = vmatprep.subr.mxu0 0.0
  %714 = vmatpush1.msra.mxu0 0.0
  %715 = vmatprep.subr.mxu0 0.0
  %716 = vmatpush1.msra.mxu0 0.0
  %717 = vmatprep.subr.mxu0 0.0
  %718 = vmatpush1.msra.mxu0 0.0
  %719 = vmatprep.mubr.f32.mxu0 0.0
  %720 = vmatmul.mubr.f32.gmra.mrb[0].mxu0 %v653
  %v721 = vpop.f32.mrb[0].mxu0
  %v722 = vadd.f32 0.0, %v721
  %v723 = vpop.f32.mrb[0].mxu0
  %724 = vdwg.mxu0
  %v725 = vadd.f32 %v648, %v722
  %v726 = vmul.f32 %v725, %v222
  %v727 = vtanh.pop %v726
  %v728 = vmul.f32 %v727, 0.5
  %v729 = vadd.f32 %v728, 0.5
  %v730 = vsel %vm221, %v727, %v729
  %v732 = vrot.slane %v641, 6
  %v734 = vmul.f32 %v730, %v732
  %736 = vrot.lane.b32.xlu0 %v730, 64
  %v737 = vpop.permute.xlu0 %736
  %v739 = vmul.f32 %v730, %v737
  %741 = vrot.lane.b32.xlu0 %v739, 32
  %v742 = vpop.permute.xlu0 %741
  %v744 = vadd.f32 %v734, %v742
  %v745 = vtanh.pop %v744
  %747 = vrot.lane.b32.xlu0 %v745, 64
  %v748 = vpop.permute.xlu0 %747
  %v750 = vmul.f32 %v730, %v748
  %v751 = vadd.f32 %v216, %v325
  %753 = vrot.lane.b32.xlu0 %v750, 32
  %v754 = vpop.permute.xlu0 %753
  %v755 = vsel %vm137, %v754, 0
  %757 = vmatprep.subr.mxu0 0.0
  %758 = vmatpush1.msra.mxu0 %v21
  %759 = vmatprep.subr.mxu0 0.0
  %760 = vmatpush1.msra.mxu0 %v22
  %761 = vmatprep.subr.mxu0 0.0
  %762 = vmatpush1.msra.mxu0 %v23
  %763 = vmatprep.subr.mxu0 0.0
  %764 = vmatpush1.msra.mxu0 %v24
  %765 = vmatprep.subr.mxu0 0.0
  %766 = vmatpush1.msra.mxu0 0.0
  %767 = vmatprep.subr.mxu0 0.0
  %768 = vmatpush1.msra.mxu0 0.0
  %769 = vmatprep.subr.mxu0 0.0
  %770 = vmatpush1.msra.mxu0 0.0
  %771 = vmatprep.subr.mxu0 0.0
  %772 = vmatpush1.msra.mxu0 0.0
  %773 = vmatprep.subr.mxu0 0.0
  %774 = vmatpush1.msra.mxu0 0.0
  %775 = vmatprep.subr.mxu0 0.0
  %776 = vmatpush1.msra.mxu0 0.0
  %777 = vmatprep.subr.mxu0 0.0
  %778 = vmatpush1.msra.mxu0 0.0
  %779 = vmatprep.subr.mxu0 0.0
  %780 = vmatpush1.msra.mxu0 0.0
  %781 = vmatprep.subr.mxu0 0.0
  %782 = vmatpush1.msra.mxu0 0.0
  %783 = vmatprep.subr.mxu0 0.0
  %784 = vmatpush1.msra.mxu0 0.0
  %785 = vmatprep.subr.mxu0 0.0
  %786 = vmatpush1.msra.mxu0 0.0
  %787 = vmatprep.subr.mxu0 0.0
  %788 = vmatpush1.msra.mxu0 0.0
  %789 = vmatprep.subr.mxu0 0.0
  %790 = vmatpush1.msra.mxu0 0.0
  %791 = vmatprep.subr.mxu0 0.0
  %792 = vmatpush1.msra.mxu0 0.0
  %793 = vmatprep.subr.mxu0 0.0
  %794 = vmatpush1.msra.mxu0 0.0
  %795 = vmatprep.subr.mxu0 0.0
  %796 = vmatpush1.msra.mxu0 0.0
  %797 = vmatprep.subr.mxu0 0.0
  %798 = vmatpush1.msra.mxu0 0.0
  %799 = vmatprep.subr.mxu0 0.0
  %800 = vmatpush1.msra.mxu0 0.0
  %801 = vmatprep.subr.mxu0 0.0
  %802 = vmatpush1.msra.mxu0 0.0
  %803 = vmatprep.subr.mxu0 0.0
  %804 = vmatpush1.msra.mxu0 0.0
  %805 = vmatprep.subr.mxu0 0.0
  %806 = vmatpush1.msra.mxu0 0.0
  %807 = vmatprep.subr.mxu0 0.0
  %808 = vmatpush1.msra.mxu0 0.0
  %809 = vmatprep.subr.mxu0 0.0
  %810 = vmatpush1.msra.mxu0 0.0
  %811 = vmatprep.subr.mxu0 0.0
  %812 = vmatpush1.msra.mxu0 0.0
  %813 = vmatprep.subr.mxu0 0.0
  %814 = vmatpush1.msra.mxu0 0.0
  %815 = vmatprep.subr.mxu0 0.0
  %816 = vmatpush1.msra.mxu0 0.0
  %817 = vmatprep.subr.mxu0 0.0
  %818 = vmatpush1.msra.mxu0 0.0
  %819 = vmatprep.subr.mxu0 0.0
  %820 = vmatpush1.msra.mxu0 0.0
  %821 = vmatprep.mubr.f32.mxu0 0.0
  %822 = vmatmul.mubr.f32.gmra.mrb[0].mxu0 %v755
  %v823 = vpop.f32.mrb[0].mxu0
  %v824 = vadd.f32 0.0, %v823
  %v825 = vpop.f32.mrb[0].mxu0
  %826 = vdwg.mxu0
  %v828 = vrot.slane %v824, 6
  %v830 = vadd.f32 %v751, %v828
  %v831 = vmul.f32 %v830, %v222
  %v832 = vtanh.pop %v831
  %v833 = vmul.f32 %v832, 0.5
  %v834 = vadd.f32 %v833, 0.5
  %v835 = vsel %vm221, %v832, %v834
  %v837 = vrot.slane %v744, 6
  %v839 = vmul.f32 %v835, %v837
  %841 = vrot.lane.b32.xlu0 %v835, 64
  %v842 = vpop.permute.xlu0 %841
  %v844 = vmul.f32 %v835, %v842
  %846 = vrot.lane.b32.xlu0 %v844, 32
  %v847 = vpop.permute.xlu0 %846
  %v849 = vadd.f32 %v839, %v847
  %v850 = vtanh.pop %v849
  %852 = vrot.lane.b32.xlu0 %v850, 64
  %v853 = vpop.permute.xlu0 %852
  %v855 = vmul.f32 %v835, %v853
  %v856 = vadd.f32 %v216, %v432
  %v858 = vrot.slane %v855, 2
  %859 = vrot.lane.b32.xlu0 %v858, 32
  %v860 = vpop.permute.xlu0 %859
  %v861 = vsel %vm137, %v860, 0
  %863 = vmatprep.subr.mxu0 0.0
  %864 = vmatpush1.msra.mxu0 %v21
  %865 = vmatprep.subr.mxu0 0.0
  %866 = vmatpush1.msra.mxu0 %v22
  %867 = vmatprep.subr.mxu0 0.0
  %868 = vmatpush1.msra.mxu0 %v23
  %869 = vmatprep.subr.mxu0 0.0
  %870 = vmatpush1.msra.mxu0 %v24
  %871 = vmatprep.subr.mxu0 0.0
  %872 = vmatpush1.msra.mxu0 0.0
  %873 = vmatprep.subr.mxu0 0.0
  %874 = vmatpush1.msra.mxu0 0.0
  %875 = vmatprep.subr.mxu0 0.0
  %876 = vmatpush1.msra.mxu0 0.0
  %877 = vmatprep.subr.mxu0 0.0
  %878 = vmatpush1.msra.mxu0 0.0
  %879 = vmatprep.subr.mxu0 0.0
  %880 = vmatpush1.msra.mxu0 0.0
  %881 = vmatprep.subr.mxu0 0.0
  %882 = vmatpush1.msra.mxu0 0.0
  %883 = vmatprep.subr.mxu0 0.0
  %884 = vmatpush1.msra.mxu0 0.0
  %885 = vmatprep.subr.mxu0 0.0
  %886 = vmatpush1.msra.mxu0 0.0
  %887 = vmatprep.subr.mxu0 0.0
  %888 = vmatpush1.msra.mxu0 0.0
  %889 = vmatprep.subr.mxu0 0.0
  %890 = vmatpush1.msra.mxu0 0.0
  %891 = vmatprep.subr.mxu0 0.0
  %892 = vmatpush1.msra.mxu0 0.0
  %893 = vmatprep.subr.mxu0 0.0
  %894 = vmatpush1.msra.mxu0 0.0
  %895 = vmatprep.subr.mxu0 0.0
  %896 = vmatpush1.msra.mxu0 0.0
  %897 = vmatprep.subr.mxu0 0.0
  %898 = vmatpush1.msra.mxu0 0.0
  %899 = vmatprep.subr.mxu0 0.0
  %900 = vmatpush1.msra.mxu0 0.0
  %901 = vmatprep.subr.mxu0 0.0
  %902 = vmatpush1.msra.mxu0 0.0
  %903 = vmatprep.subr.mxu0 0.0
  %904 = vmatpush1.msra.mxu0 0.0
  %905 = vmatprep.subr.mxu0 0.0
  %906 = vmatpush1.msra.mxu0 0.0
  %907 = vmatprep.subr.mxu0 0.0
  %908 = vmatpush1.msra.mxu0 0.0
  %909 = vmatprep.subr.mxu0 0.0
  %910 = vmatpush1.msra.mxu0 0.0
  %911 = vmatprep.subr.mxu0 0.0
  %912 = vmatpush1.msra.mxu0 0.0
  %913 = vmatprep.subr.mxu0 0.0
  %914 = vmatpush1.msra.mxu0 0.0
  %915 = vmatprep.subr.mxu0 0.0
  %916 = vmatpush1.msra.mxu0 0.0
  %917 = vmatprep.subr.mxu0 0.0
  %918 = vmatpush1.msra.mxu0 0.0
  %919 = vmatprep.subr.mxu0 0.0
  %920 = vmatpush1.msra.mxu0 0.0
  %921 = vmatprep.subr.mxu0 0.0
  %922 = vmatpush1.msra.mxu0 0.0
  %923 = vmatprep.subr.mxu0 0.0
  %924 = vmatpush1.msra.mxu0 0.0
  %925 = vmatprep.subr.mxu0 0.0
  %926 = vmatpush1.msra.mxu0 0.0
  %927 = vmatprep.mubr.f32.mxu0 0.0
  %928 = vmatmul.mubr.f32.gmra.mrb[0].mxu0 %v861
  %v929 = vpop.f32.mrb[0].mxu0
  %v930 = vadd.f32 0.0, %v929
  %v931 = vpop.f32.mrb[0].mxu0
  %932 = vdwg.mxu0
  %v934 = vrot.slane %v930, 4
  %v936 = vadd.f32 %v856, %v934
  %v937 = vmul.f32 %v936, %v222
  %v938 = vtanh.pop %v937
  %v939 = vmul.f32 %v938, 0.5
  %v940 = vadd.f32 %v939, 0.5
  %v941 = vsel %vm221, %v938, %v940
  %v943 = vrot.slane %v849, 6
  %v945 = vmul.f32 %v941, %v943
  %947 = vrot.lane.b32.xlu0 %v941, 64
  %v948 = vpop.permute.xlu0 %947
  %v950 = vmul.f32 %v941, %v948
  %952 = vrot.lane.b32.xlu0 %v950, 32
  %v953 = vpop.permute.xlu0 %952
  %v955 = vadd.f32 %v945, %v953
  %v956 = vtanh.pop %v955
  %958 = vrot.lane.b32.xlu0 %v956, 64
  %v959 = vpop.permute.xlu0 %958
  %v961 = vmul.f32 %v941, %v959
  %v962 = vadd.f32 %v216, %v540
  %v964 = vrot.slane %v961, 4
  %965 = vrot.lane.b32.xlu0 %v964, 32
  %v966 = vpop.permute.xlu0 %965
  %v967 = vsel %vm137, %v966, 0
  %969 = vmatprep.subr.mxu0 0.0
  %970 = vmatpush1.msra.mxu0 %v21
  %971 = vmatprep.subr.mxu0 0.0
  %972 = vmatpush1.msra.mxu0 %v22
  %973 = vmatprep.subr.mxu0 0.0
  %974 = vmatpush1.msra.mxu0 %v23
  %975 = vmatprep.subr.mxu0 0.0
  %976 = vmatpush1.msra.mxu0 %v24
  %977 = vmatprep.subr.mxu0 0.0
  %978 = vmatpush1.msra.mxu0 0.0
  %979 = vmatprep.subr.mxu0 0.0
  %980 = vmatpush1.msra.mxu0 0.0
  %981 = vmatprep.subr.mxu0 0.0
  %982 = vmatpush1.msra.mxu0 0.0
  %983 = vmatprep.subr.mxu0 0.0
  %984 = vmatpush1.msra.mxu0 0.0
  %985 = vmatprep.subr.mxu0 0.0
  %986 = vmatpush1.msra.mxu0 0.0
  %987 = vmatprep.subr.mxu0 0.0
  %988 = vmatpush1.msra.mxu0 0.0
  %989 = vmatprep.subr.mxu0 0.0
  %990 = vmatpush1.msra.mxu0 0.0
  %991 = vmatprep.subr.mxu0 0.0
  %992 = vmatpush1.msra.mxu0 0.0
  %993 = vmatprep.subr.mxu0 0.0
  %994 = vmatpush1.msra.mxu0 0.0
  %995 = vmatprep.subr.mxu0 0.0
  %996 = vmatpush1.msra.mxu0 0.0
  %997 = vmatprep.subr.mxu0 0.0
  %998 = vmatpush1.msra.mxu0 0.0
  %999 = vmatprep.subr.mxu0 0.0
  %1000 = vmatpush1.msra.mxu0 0.0
  %1001 = vmatprep.subr.mxu0 0.0
  %1002 = vmatpush1.msra.mxu0 0.0
  %1003 = vmatprep.subr.mxu0 0.0
  %1004 = vmatpush1.msra.mxu0 0.0
  %1005 = vmatprep.subr.mxu0 0.0
  %1006 = vmatpush1.msra.mxu0 0.0
  %1007 = vmatprep.subr.mxu0 0.0
  %1008 = vmatpush1.msra.mxu0 0.0
  %1009 = vmatprep.subr.mxu0 0.0
  %1010 = vmatpush1.msra.mxu0 0.0
  %1011 = vmatprep.subr.mxu0 0.0
  %1012 = vmatpush1.msra.mxu0 0.0
  %1013 = vmatprep.subr.mxu0 0.0
  %1014 = vmatpush1.msra.mxu0 0.0
  %1015 = vmatprep.subr.mxu0 0.0
  %1016 = vmatpush1.msra.mxu0 0.0
  %1017 = vmatprep.subr.mxu0 0.0
  %1018 = vmatpush1.msra.mxu0 0.0
  %1019 = vmatprep.subr.mxu0 0.0
  %1020 = vmatpush1.msra.mxu0 0.0
  %1021 = vmatprep.subr.mxu0 0.0
  %1022 = vmatpush1.msra.mxu0 0.0
  %1023 = vmatprep.subr.mxu0 0.0
  %1024 = vmatpush1.msra.mxu0 0.0
  %1025 = vmatprep.subr.mxu0 0.0
  %1026 = vmatpush1.msra.mxu0 0.0
  %1027 = vmatprep.subr.mxu0 0.0
  %1028 = vmatpush1.msra.mxu0 0.0
  %1029 = vmatprep.subr.mxu0 0.0
  %1030 = vmatpush1.msra.mxu0 0.0
  %1031 = vmatprep.subr.mxu0 0.0
  %1032 = vmatpush1.msra.mxu0 0.0
  %1033 = vmatprep.mubr.f32.mxu0 0.0
  %1034 = vmatmul.mubr.f32.gmra.mrb[0].mxu0 %v967
  %v1035 = vpop.f32.mrb[0].mxu0
  %v1036 = vadd.f32 0.0, %v1035
  %v1037 = vpop.f32.mrb[0].mxu0
  %1038 = vdwg.mxu0
  %v1040 = vrot.slane %v1036, 2
  %v1042 = vadd.f32 %v962, %v1040
  %v1043 = vmul.f32 %v1042, %v222
  %v1044 = vtanh.pop %v1043
  %v1045 = vmul.f32 %v1044, 0.5
  %v1046 = vadd.f32 %v1045, 0.5
  %v1047 = vsel %vm221, %v1044, %v1046
  %v1049 = vrot.slane %v955, 6
  %v1051 = vmul.f32 %v1047, %v1049
  %1053 = vrot.lane.b32.xlu0 %v1047, 64
  %v1054 = vpop.permute.xlu0 %1053
  %v1056 = vmul.f32 %v1047, %v1054
  %1058 = vrot.lane.b32.xlu0 %v1056, 32
  %v1059 = vpop.permute.xlu0 %1058
  %v1061 = vadd.f32 %v1051, %v1059
  %v1062 = vtanh.pop %v1061
  %1064 = vrot.lane.b32.xlu0 %v1062, 64
  %v1065 = vpop.permute.xlu0 %1064
  %v1067 = vmul.f32 %v1047, %v1065
  %vm1068 = vcmask 1041408
  %v1069 = vsel %vm1068, %v324, %v431
  %vm1070 = vcmask 1043456
  %v1071 = vsel %vm1070, %v1069, %v539
  %vm1072 = vcmask 1045504
  %v1073 = vsel %vm1072, %v1071, %v647
  %v1074 = vsel %vm1068, %v750, %v855
  %v1075 = vsel %vm1070, %v1074, %v961
  %v1076 = vsel %vm1072, %v1075, %v1067
  %v1077 = vlaneseq
  %v1078 = vshrl.u32 %v1077, 7
  %v1079 = vsub.s32 2, %v1078
  %v1080 = vrot.slane %v29, %v1079
  %1083 = vrot.lane.b32.xlu0 %v1073, 32
  %v1084 = vpop.permute.xlu0 %1083
  %1085 = vrot.lane.b32.xlu0 %v1076, 32
  %v1086 = vpop.permute.xlu0 %1085
  %v1087 = vsel %vm137, %v1084, 0
  %v1089 = vsel %vm137, %v1086, 0
  %1091 = vmatprep.subr.mxu0 0.0
  %1092 = vmatpush1.msra.mxu0 %v25
  %1093 = vmatprep.subr.mxu0 0.0
  %1094 = vmatpush1.msra.mxu0 %v26
  %1095 = vmatprep.subr.mxu0 0.0
  %1096 = vmatpush1.msra.mxu0 %v27
  %1097 = vmatprep.subr.mxu0 0.0
  %1098 = vmatpush1.msra.mxu0 %v28
  %1099 = vmatprep.subr.mxu0 0.0
  %1100 = vmatpush1.msra.mxu0 0.0
  %1101 = vmatprep.subr.mxu0 0.0
  %1102 = vmatpush1.msra.mxu0 0.0
  %1103 = vmatprep.subr.mxu0 0.0
  %1104 = vmatpush1.msra.mxu0 0.0
  %1105 = vmatprep.subr.mxu0 0.0
  %1106 = vmatpush1.msra.mxu0 0.0
  %1107 = vmatprep.subr.mxu0 0.0
  %1108 = vmatpush1.msra.mxu0 0.0
  %1109 = vmatprep.subr.mxu0 0.0
  %1110 = vmatpush1.msra.mxu0 0.0
  %1111 = vmatprep.subr.mxu0 0.0
  %1112 = vmatpush1.msra.mxu0 0.0
  %1113 = vmatprep.subr.mxu0 0.0
  %1114 = vmatpush1.msra.mxu0 0.0
  %1115 = vmatprep.subr.mxu0 0.0
  %1116 = vmatpush1.msra.mxu0 0.0
  %1117 = vmatprep.subr.mxu0 0.0
  %1118 = vmatpush1.msra.mxu0 0.0
  %1119 = vmatprep.subr.mxu0 0.0
  %1120 = vmatpush1.msra.mxu0 0.0
  %1121 = vmatprep.subr.mxu0 0.0
  %1122 = vmatpush1.msra.mxu0 0.0
  %1123 = vmatprep.subr.mxu0 0.0
  %1124 = vmatpush1.msra.mxu0 0.0
  %1125 = vmatprep.subr.mxu0 0.0
  %1126 = vmatpush1.msra.mxu0 0.0
  %1127 = vmatprep.subr.mxu0 0.0
  %1128 = vmatpush1.msra.mxu0 0.0
  %1129 = vmatprep.subr.mxu0 0.0
  %1130 = vmatpush1.msra.mxu0 0.0
  %1131 = vmatprep.subr.mxu0 0.0
  %1132 = vmatpush1.msra.mxu0 0.0
  %1133 = vmatprep.subr.mxu0 0.0
  %1134 = vmatpush1.msra.mxu0 0.0
  %1135 = vmatprep.subr.mxu0 0.0
  %1136 = vmatpush1.msra.mxu0 0.0
  %1137 = vmatprep.subr.mxu0 0.0
  %1138 = vmatpush1.msra.mxu0 0.0
  %1139 = vmatprep.subr.mxu0 0.0
  %1140 = vmatpush1.msra.mxu0 0.0
  %1141 = vmatprep.subr.mxu0 0.0
  %1142 = vmatpush1.msra.mxu0 0.0
  %1143 = vmatprep.subr.mxu0 0.0
  %1144 = vmatpush1.msra.mxu0 0.0
  %1145 = vmatprep.subr.mxu0 0.0
  %1146 = vmatpush1.msra.mxu0 0.0
  %1147 = vmatprep.subr.mxu0 0.0
  %1148 = vmatpush1.msra.mxu0 0.0
  %1149 = vmatprep.subr.mxu0 0.0
  %1150 = vmatpush1.msra.mxu0 0.0
  %1151 = vmatprep.subr.mxu0 0.0
  %1152 = vmatpush1.msra.mxu0 0.0
  %1153 = vmatprep.subr.mxu0 0.0
  %1154 = vmatpush1.msra.mxu0 0.0
  %1155 = vmatprep.mubr.f32.mxu0 0.0
  %1156 = vmatmul.mubr.f32.gmra.mrb[0].mxu0 %v1087
  %v1157 = vpop.f32.mrb[0].mxu0
  %v1158 = vadd.f32 %v1080, %v1157
  %v1159 = vpop.f32.mrb[0].mxu0
  %1160 = vmatprep.mubr.f32.mxu0 0.0
  %1161 = vmatmul.mubr.f32.gmra.mrb[0].mxu0 %v1089
  %v1162 = vpop.f32.mrb[0].mxu0
  %v1163 = vadd.f32 %v1080, %v1162
  %v1164 = vpop.f32.mrb[0].mxu0
  %1165 = vdwg.mxu0
  %1166 = vmax.xlane.f32.xlu0 %v1158
  %v1167 = vpop.xlane.xlu0 %1166
  %1168 = vmax.xlane.f32.xlu0 %v1163
  %v1169 = vpop.xlane.xlu0 %1168
  %v1170 = vsub.f32 %v1158, %v1167
  %v1171 = vsub.f32 %v1163, %v1169
  %v1172 = vmul.f32 %v1170, 1.442695
  %v1173 = vpow.pop %v1172
  %v1174 = vmul.f32 %v1171, 1.442695
  %v1175 = vpow.pop %v1174
  %1176 = vadd.xlane.f32.xlu0 %v1173
  %v1177 = vpop.xlane.xlu0 %1176
  %1178 = vadd.xlane.f32.xlu0 %v1175
  %v1179 = vpop.xlane.xlu0 %1178
  %v1180 = vlog2.pop %v1177
  %v1181 = vmul.f32 %v1180, 0.6931472
  %v1182 = vlog2.pop %v1179
  %v1183 = vmul.f32 %v1182, 0.6931472
  %v1184 = vadd.f32 %v1167, %v1181
  %v1185 = vadd.f32 %v1169, %v1183
  %v1186 = vsub.f32 %v1158, %v1184
  %v1187 = vsub.f32 %v1163, %v1185
  %1188 = vst [vmem:[%s4] sm:$0xff] %v1186
  %1189 = vst [vmem:[%s4 + $0x8] sm:$0xff] %v1187
  // Predicated region
  $region18: #{captioning_forward.1} parent=0 // pred_check
    _
  $region19: #{captioning_forward.1} parent=0 // pred_check_branch
    %1191 = sbr.rel (0) target = $region21
  $region20: #{captioning_forward.1} parent=0 // pred_region
    _
  $region21: #{captioning_forward.1} parent=0 // pred_fallthru
    _
  // Predicated region
  $region22: #{captioning_forward.1} parent=0 // pred_check
    _
  $region23: #{captioning_forward.1} parent=0 // pred_check_branch
    %1193 = sbr.rel (0) target = $region25
  $region24: #{captioning_forward.1} parent=0 // pred_region
    _
  $region25: #{captioning_forward.1} parent=0 // pred_fallthru
    _

</llo_original>
